<compile_context>
chip_gen: v7x
topology: tpu7x:2x2x1
jax: 0.10.0
libtpu: 0.0.40
codegen_flags: <defaults>
</compile_context>

<pallas_src>
import jax
import jax.numpy as jnp
from jax.experimental import pallas as pl
from jax.experimental.pallas import tpu as pltpu


def _round_up(x, m):
    return (x + m - 1) // m * m


# ----------------------------------------------------------------------------- kernels
def _xw_kernel(x_ref, w_ref, out_ref):
    """XW1 = X @ W1, computed once; stored bf16 for the MXU-bound A-passes."""
    out_ref[...] = jnp.dot(
        x_ref[...], w_ref[...], preferred_element_type=jnp.float32
    ).astype(out_ref.dtype)


def _gcn_hidden_kernel(a_ref, xw1_ref, b1_ref, wcat_ref, g_ref):
    """G_tile = relu(A_tile @ (X@W1) + b1) @ W_cat  (layer 1 + fused layer-2 feature matmul)."""
    h = jnp.dot(a_ref[...], xw1_ref[...], preferred_element_type=jnp.float32)
    h = jnp.maximum(h + b1_ref[...], 0.0).astype(wcat_ref.dtype)
    g_ref[...] = jnp.dot(
        h, wcat_ref[...], preferred_element_type=jnp.float32
    ).astype(g_ref.dtype)


def _gcn_out_kernel(a_ref, g_ref, bcat_ref, out_ref):
    """out_tile = A_tile @ G + b_cat  ->  [mu | logstd] lane-dense slab (f32)."""
    acc = jnp.dot(a_ref[...], g_ref[...], preferred_element_type=jnp.float32)
    out_ref[...] = (acc + bcat_ref[...]).astype(out_ref.dtype)


# ----------------------------------------------------------------------------- wrapper
def variational_gcn_encoder(x, a_hat, params, *, block_rows=256):
    """x: [N, Cin] f32, a_hat: [N, N] f32 normalized adjacency.
    Returns (mu, logstd), each [N, out_channels] f32."""
    n, _ = x.shape
    hidden = params["w1"].shape[1]
    out_c = params["w_mu"].shape[1]

    # -- fuse conv_mu / conv_logstd into one second-layer A-pass ----------------------
    w_cat = jnp.concatenate([params["w_mu"], params["w_logstd"]], axis=1)   # [H, 2*Cout]
    b_cat = jnp.concatenate([params["b_mu"], params["b_logstd"]], axis=1)   # [1, 2*Cout]

    # -- pad to lane-dense / tile-friendly shapes -------------------------------------
    h_pad = _round_up(hidden, 128)        # hidden channels -> full 128-lane vregs
    c2_pad = _round_up(2 * out_c, 128)    # fused output channels -> unmasked stores
    n_pad = _round_up(n, 8)               # sublane multiple
    tm = min(block_rows, n_pad)           # A_hat row-tile height (multiple of 8)
    n_pad = _round_up(n_pad, tm)
    nt = n_pad // tm

    f32, bf16 = jnp.float32, jnp.bfloat16
    a_p = jnp.pad(a_hat, ((0, n_pad - n), (0, n_pad - n))).astype(bf16)
    x_p = jnp.pad(x, ((0, n_pad - n), (0, 0))).astype(f32)
    w1_p = jnp.pad(params["w1"], ((0, 0), (0, h_pad - hidden))).astype(f32)
    b1_p = jnp.pad(params["b1"], ((0, 0), (0, h_pad - hidden))).astype(f32)
    wc_p = jnp.pad(w_cat, ((0, h_pad - hidden), (0, c2_pad - 2 * out_c))).astype(bf16)
    bc_p = jnp.pad(b_cat, ((0, 0), (0, c2_pad - 2 * out_c))).astype(f32)

    vmem = pl.BlockSpec(memory_space=pltpu.MemorySpace.VMEM)
    # Explicit scoped-VMEM budget: the bf16 row tiles + resident feature slabs fit in
    # 32 MiB on every generation (incl. v7x's 64 MiB physical VMEM); raise it for
    # bigger tiles on 128 MiB parts (v5e/v6e).
    cparams = pltpu.CompilerParams(
        dimension_semantics=("parallel",),
        vmem_limit_bytes=32 * 1024 * 1024,
    )

    # Stage 0: XW1 = X @ W1 — computed exactly once (tiny), stored bf16.
    xw1 = pl.pallas_call(
        _xw_kernel,
        out_shape=jax.ShapeDtypeStruct((n_pad, h_pad), bf16),
        in_specs=[vmem, vmem],
        out_specs=vmem,
    )(x_p, w1_p)

    # Stage 1: G = relu(A_hat @ XW1 + b1) @ W_cat   (row-tiled, pipelined, parallel).
    g = pl.pallas_call(
        _gcn_hidden_kernel,
        out_shape=jax.ShapeDtypeStruct((n_pad, c2_pad), bf16),
        grid=(nt,),
        in_specs=[
            pl.BlockSpec((tm, n_pad), lambda i: (i, 0)),       # A_hat row tile (bf16)
            pl.BlockSpec((n_pad, h_pad), lambda i: (0, 0)),    # XW1, resident
            pl.BlockSpec((1, h_pad), lambda i: (0, 0)),        # b1
            pl.BlockSpec((h_pad, c2_pad), lambda i: (0, 0)),   # W_cat, resident
        ],
        out_specs=pl.BlockSpec((tm, c2_pad), lambda i: (i, 0)),
        compiler_params=cparams,
    )(a_p, xw1, b1_p, wc_p)

    # Stage 2: OUT = A_hat @ G + b_cat  ->  [mu | logstd] lane-dense slab (f32).
    out = pl.pallas_call(
        _gcn_out_kernel,
        out_shape=jax.ShapeDtypeStruct((n_pad, c2_pad), f32),
        grid=(nt,),
        in_specs=[
            pl.BlockSpec((tm, n_pad), lambda i: (i, 0)),       # A_hat row tile
            pl.BlockSpec((n_pad, c2_pad), lambda i: (0, 0)),   # G, resident
            pl.BlockSpec((1, c2_pad), lambda i: (0, 0)),       # b_cat
        ],
        out_specs=pl.BlockSpec((tm, c2_pad), lambda i: (i, 0)),
        compiler_params=cparams,
    )(a_p, g, bc_p)

    mu = out[:n, :out_c]
    logstd = out[:n, out_c:2 * out_c]
    return mu, logstd


# ----------------------------------------------------------------------------- glue
def gcn_normalize(edge_index, num_nodes):
    """Dense A_hat = D^{-1/2}(A + I)D^{-1/2}, matching PyG gcn_norm defaults."""
    src, dst = edge_index[0], edge_index[1]
    loop = jnp.arange(num_nodes)
    src = jnp.concatenate([src, loop])           # add self loops
    dst = jnp.concatenate([dst, loop])
    w = jnp.ones(src.shape[0], jnp.float32)
    deg = jnp.zeros(num_nodes, jnp.float32).at[dst].add(w)
    dis = jnp.where(deg > 0, jax.lax.rsqrt(deg), 0.0)
    norm = dis[src] * w * dis[dst]
    a_hat = jnp.zeros((num_nodes, num_nodes), jnp.float32).at[dst, src].add(norm)
    return a_hat


def init_params(key, in_channels, out_channels):
    hidden = 2 * out_channels
    k1, k2, k3, k4, k5, k6 = jax.random.split(key, 6)
    # GCNConv weights stored as [in, out] for right-multiplication; biases exercised
    # with small nonzero values (PyG zero-inits them).
    return {
        "w1":       jax.random.normal(k1, (in_channels, hidden), jnp.float32) * 0.2,
        "b1":       jax.random.normal(k2, (1, hidden), jnp.float32) * 0.01,
        "w_mu":     jax.random.normal(k3, (hidden, out_channels), jnp.float32) * 0.2,
        "b_mu":     jax.random.normal(k4, (1, out_channels), jnp.float32) * 0.01,
        "w_logstd": jax.random.normal(k5, (hidden, out_channels), jnp.float32) * 0.2,
        "b_logstd": jax.random.normal(k6, (1, out_channels), jnp.float32) * 0.01,
    }


def _reference(x, a_hat, params):
    h = jnp.maximum(a_hat @ (x @ params["w1"]) + params["b1"], 0.0)
    mu = a_hat @ (h @ params["w_mu"]) + params["b_mu"]
    logstd = a_hat @ (h @ params["w_logstd"]) + params["b_logstd"]
    return mu, logstd


if __name__ == "__main__":
    N, in_channels, out_channels = 16, 8, 4   # module default: out_channels = 4

    key = jax.random.PRNGKey(0)
    kx, kp = jax.random.split(key)
    x = jax.random.normal(kx, (N, in_channels), jnp.float32)

    # Deterministic undirected ring graph: edges (i -> i+1) and (i+1 -> i).
    i = jnp.arange(N)
    edge_index = jnp.stack([
        jnp.concatenate([i, (i + 1) % N]),
        jnp.concatenate([(i + 1) % N, i]),
    ]).astype(jnp.int32)                       # [2, 2N]

    a_hat = gcn_normalize(edge_index, N)
    params = init_params(kp, in_channels, out_channels)

    mu, logstd = variational_gcn_encoder(x, a_hat, params)
    jax.block_until_ready((mu, logstd))

    assert mu.shape == (N, out_channels) and logstd.shape == (N, out_channels)

    mu_ref, logstd_ref = _reference(x, a_hat, params)
    err = max(float(jnp.max(jnp.abs(mu - mu_ref))),
              float(jnp.max(jnp.abs(logstd - logstd_ref))))
    assert err < 5e-2, f"numerical mismatch vs f32 reference: {err}"

    print("KERNEL_OK")
</pallas_src>

<mosaic_0001>
module attributes {stable_mosaic.version = 11 : i64} {
  func.func @_xw_kernel(%arg0: memref<16x8xf32, #tpu.memory_space<vmem>>, %arg1: memref<8x128xf32, #tpu.memory_space<vmem>>, %arg2: memref<16x128xbf16, #tpu.memory_space<vmem>>) attributes {dimension_semantics = [], scalar_prefetch = 0 : i64, scratch_operands = 0 : i64, tpu.core_type = #tpu.core_type<tc>} {
    %c0 = arith.constant 0 : index
    %c0_0 = arith.constant 0 : index
    %0 = vector.load %arg0[%c0, %c0_0] : memref<16x8xf32, #tpu.memory_space<vmem>>, vector<16x8xf32>
    %c0_1 = arith.constant 0 : index
    %c0_2 = arith.constant 0 : index
    %1 = vector.load %arg1[%c0_1, %c0_2] : memref<8x128xf32, #tpu.memory_space<vmem>>, vector<8x128xf32>
    %cst = arith.constant dense<0.000000e+00> : vector<16x128xf32>
    %2 = tpu.matmul %0, %1, %cst {dimension_numbers = #tpu.dot_dimension_numbers<[1], [0], [0], [1], [0, 0, 1, 1], [], []>} : vector<16x8xf32>, vector<8x128xf32>, vector<16x128xf32> -> vector<16x128xf32>
    %3 = arith.truncf %2 : vector<16x128xf32> to vector<16x128xbf16>
    %c0_3 = arith.constant 0 : index
    %c0_4 = arith.constant 0 : index
    %4 = vector.load %arg2[%c0_3, %c0_4] : memref<16x128xbf16, #tpu.memory_space<vmem>>, vector<16x128xbf16>
    tpu.vector_store %arg2[%c0_3, %c0_4], %3 {strides = array<i32>} : memref<16x128xbf16, #tpu.memory_space<vmem>>, vector<16x128xbf16>,
    return
  }
}

</mosaic_0001>

<llo_original>
// kernel: tpu_custom_call.1
$region0: #{tpu_custom_call.1}
  #allocation0 [shape = 'u32[]', space=smem, size = 0x4, offset = 0x4, fixed_abs, tag = 'smem constant byte address 0x4 - core index']
  #allocation1 [shape = 'u32[144,128]{1,0:T(1,128)}', space=vmem, size = 0x12000, scoped, tag = 'internal scratch']
  %s0 = inlined_call_operand.vmem [shape: f32[16,8], index: 0, kind: input, shape index: {}]
  %s1 = inlined_call_operand.vmem [shape: f32[8,128], index: 1, kind: input, shape index: {}]
  %s2 = inlined_call_operand.hbm [shape: bf16[16,128], index: 2, kind: output, shape index: {}]
  %s3 = sld [smem:[#allocation0]]
  $region18: #{tpu_custom_call.1} parent=0
    _
  %s5 = ssub.s32 1, %s3
  %s6 = scalar_select 0, %s5, %s3
  $region1: #{tpu_custom_call.1} parent=0
    #allocation2 [shape = 'u8[4096]{0}', space=vmem, size = 0x1000, scoped, tag = 'output window, operand 0, single buffered']
    #allocation3 [shape = 's32[1]{0}', space=sflag, size = 0x4, scoped, tag = 'scoped memory for tpu_custom_call.1']
    %7 = vsyncpa [#allocation3], 0
    // Predicated region
    $region2: #{tpu_custom_call.1} parent=1 // pred_check
      _
    $region3: #{tpu_custom_call.1} parent=1 // pred_check_branch
      %9 = sbr.rel (0) target = $region5
    $region4: #{tpu_custom_call.1} parent=1 // pred_region
      _
    $region5: #{tpu_custom_call.1} parent=1 // pred_fallthru
      _
    // Predicated region
    $region6: #{tpu_custom_call.1} parent=1 // pred_check
      _
    $region7: #{tpu_custom_call.1} parent=1 // pred_check_branch
      %11 = sbr.rel (0) target = $region9
    $region8: #{tpu_custom_call.1} parent=1 // pred_region
      _
    $region9: #{tpu_custom_call.1} parent=1 // pred_fallthru
      _
    %v12 = vld [vmem:[%s0] sm:$0xff]
    %v13 = vld [vmem:[%s0 + $0x8] sm:$0xff]
    %v14 = vld [vmem:[%s1] sm:$0xff]
    %vm15 = vcmask 64512
    %v17 = vsel %vm15, %v12, 0
    %v20 = vsel %vm15, %v13, 0
    %22 = vmatprep.subr.mxu0 0.0
    %23 = vmatpush1.msra.mxu0 %v14
    %24 = vmatprep.subr.mxu0 0.0
    %25 = vmatpush1.msra.mxu0 0.0
    %26 = vmatprep.subr.mxu0 0.0
    %27 = vmatpush1.msra.mxu0 0.0
    %28 = vmatprep.subr.mxu0 0.0
    %29 = vmatpush1.msra.mxu0 0.0
    %30 = vmatprep.subr.mxu0 0.0
    %31 = vmatpush1.msra.mxu0 0.0
    %32 = vmatprep.subr.mxu0 0.0
    %33 = vmatpush1.msra.mxu0 0.0
    %34 = vmatprep.subr.mxu0 0.0
    %35 = vmatpush1.msra.mxu0 0.0
    %36 = vmatprep.subr.mxu0 0.0
    %37 = vmatpush1.msra.mxu0 0.0
    %38 = vmatprep.subr.mxu0 0.0
    %39 = vmatpush1.msra.mxu0 0.0
    %40 = vmatprep.subr.mxu0 0.0
    %41 = vmatpush1.msra.mxu0 0.0
    %42 = vmatprep.subr.mxu0 0.0
    %43 = vmatpush1.msra.mxu0 0.0
    %44 = vmatprep.subr.mxu0 0.0
    %45 = vmatpush1.msra.mxu0 0.0
    %46 = vmatprep.subr.mxu0 0.0
    %47 = vmatpush1.msra.mxu0 0.0
    %48 = vmatprep.subr.mxu0 0.0
    %49 = vmatpush1.msra.mxu0 0.0
    %50 = vmatprep.subr.mxu0 0.0
    %51 = vmatpush1.msra.mxu0 0.0
    %52 = vmatprep.subr.mxu0 0.0
    %53 = vmatpush1.msra.mxu0 0.0
    %54 = vmatprep.subr.mxu0 0.0
    %55 = vmatpush1.msra.mxu0 0.0
    %56 = vmatprep.subr.mxu0 0.0
    %57 = vmatpush1.msra.mxu0 0.0
    %58 = vmatprep.subr.mxu0 0.0
    %59 = vmatpush1.msra.mxu0 0.0
    %60 = vmatprep.subr.mxu0 0.0
    %61 = vmatpush1.msra.mxu0 0.0
    %62 = vmatprep.subr.mxu0 0.0
    %63 = vmatpush1.msra.mxu0 0.0
    %64 = vmatprep.subr.mxu0 0.0
    %65 = vmatpush1.msra.mxu0 0.0
    %66 = vmatprep.subr.mxu0 0.0
    %67 = vmatpush1.msra.mxu0 0.0
    %68 = vmatprep.subr.mxu0 0.0
    %69 = vmatpush1.msra.mxu0 0.0
    %70 = vmatprep.subr.mxu0 0.0
    %71 = vmatpush1.msra.mxu0 0.0
    %72 = vmatprep.subr.mxu0 0.0
    %73 = vmatpush1.msra.mxu0 0.0
    %74 = vmatprep.subr.mxu0 0.0
    %75 = vmatpush1.msra.mxu0 0.0
    %76 = vmatprep.subr.mxu0 0.0
    %77 = vmatpush1.msra.mxu0 0.0
    %78 = vmatprep.subr.mxu0 0.0
    %79 = vmatpush1.msra.mxu0 0.0
    %80 = vmatprep.subr.mxu0 0.0
    %81 = vmatpush1.msra.mxu0 0.0
    %82 = vmatprep.subr.mxu0 0.0
    %83 = vmatpush1.msra.mxu0 0.0
    %84 = vmatprep.subr.mxu0 0.0
    %85 = vmatpush1.msra.mxu0 0.0
    %86 = vmatprep.mubr.f32.mxu0 0.0
    %87 = vmatmul.mubr.f32.gmra.mrb[0].mxu0 %v17
    %v88 = vpop.f32.mrb[0].mxu0
    %v89 = vadd.f32 0.0, %v88
    %v90 = vpop.f32.mrb[0].mxu0
    %91 = vmatprep.mubr.f32.mxu0 0.0
    %92 = vmatmul.mubr.f32.gmra.mrb[0].mxu0 %v20
    %v93 = vpop.f32.mrb[0].mxu0
    %v94 = vadd.f32 0.0, %v93
    %v95 = vpop.f32.mrb[0].mxu0
    %96 = vdwg.mxu0
    %v97 = vpack.c.bf16 %v94, %v89
    %v99 = vunpack.c.l.b16 %v97
    %v100 = vunpack.c.h.b16 %v97
    %v101 = vpack.c.b16 %v99, %v99
    %v102 = vpack.c.b16 %v100, %v100
    %105 = vst [vmem:[#allocation2] sm:$0xf] %v101
    %106 = vst [vmem:[#allocation2 + $0x4] sm:$0xf] %v102
    // Predicated region
    $region10: #{tpu_custom_call.1} parent=1 // pred_check
      _
    $region11: #{tpu_custom_call.1} parent=1 // pred_check_branch
      %108 = sbr.rel (0) target = $region13
    $region12: #{tpu_custom_call.1} parent=1 // pred_region
      %s110 = ssub.s32 128, 128
      %111 = vsyncadd [#allocation3], %s110
      %s112 = sshll.u32 [#allocation2], 4
      %s113 = int_to_ptr.vmem [resolvable:$true] %s112
      %118 = dma.vmem_to_hbm [thread:$0]  %s113, 128, %s2, [#allocation3], 64, 64, 4
    $region13: #{tpu_custom_call.1} parent=1 // pred_fallthru
      _
    // Predicated region
    $region14: #{tpu_custom_call.1} parent=1 // pred_check
      _
    $region15: #{tpu_custom_call.1} parent=1 // pred_check_branch
      %120 = sbr.rel (0) target = $region17
    $region16: #{tpu_custom_call.1} parent=1 // pred_region
      %121 = dma.done [#allocation3], 128
    $region17: #{tpu_custom_call.1} parent=1 // pred_fallthru
      _
    %122 = vsyncpa [#allocation3], 1

</llo_original>
